<compile_context>
chip_gen: v6e
topology: v6e:2x2x1
jax: 0.10.0
libtpu: 0.0.40
codegen_flags: <defaults>
</compile_context>

<pallas_src>
import functools

import jax
import jax.numpy as jnp
from jax.experimental import pallas as pl
from jax.experimental.pallas import tpu as pltpu

_LANE = 128   # lane width of the packed parameter buffer
_SUB = 8      # sublane alignment of each packed parameter's row range


# ------------------------------ fused kernel --------------------------------
def _eye(n):
    r = jax.lax.broadcasted_iota(jnp.int32, (n, n), 0)
    c = jax.lax.broadcasted_iota(jnp.int32, (n, n), 1)
    return (r == c).astype(jnp.float32)


def _model_kernel(x_ref, A_ref, p_ref, o_ref, *,
                  layout, n_lin1, n_gnn, n_lin2, sigma, a, alpha, sym_adj):
    """Whole-model forward for ONE graph (one grid step).

    x_ref: (N, D_in)   A_ref: (N, N)
    p_ref: (R, 128) packed parameter buffer; `layout` is a static tuple of
           (row_offset, rows, cols) entries consumed in order:
           lin1: (W^T, b)*n_lin1, gnn: (W1^T, b1, W2^T, theta)*n_gnn,
           lin2: (W^T, b)*n_lin2.  Weights are pre-transposed to (in, out).
    """
    x = x_ref[...]
    A = A_ref[...]
    N = A.shape[0]
    I = _eye(N)                       # only used for the small vector "transpose"

    idx = [0]

    def getp():
        off, r, c = layout[idx[0]]
        idx[0] += 1
        return p_ref[off:off + r, 0:c]

    def lane_t(col):                  # (N,1) -> (1,N) row copy of a column vector
        return jnp.sum(col * I, axis=0, keepdims=True)

    def dense(v, Wt, b, leaky):
        # Wt is (in, out): plain (1,0) contraction on the MXU, no transpose.
        y = jnp.dot(v, Wt, preferred_element_type=jnp.float32)
        if b is not None:             # statically skipped when absent
            y = y + b
        if leaky is not None:         # fused LeakyReLU(alpha)
            y = jnp.where(y >= 0.0, y, leaky * y)
        return y

    def laplacian(M, sym):
        # D^{-1/2} M D^{-1/2} via broadcast row/column scaling (no diag matmuls).
        d = jnp.sum(M, axis=-1, keepdims=True)              # (N,1) row sums
        dis = jax.lax.rsqrt(d)
        if sym:
            # symmetric M: column sums == row sums -> lane-oriented vector for
            # free (single axis-0 reduce, no identity-mask multiply).
            dis_lane = jax.lax.rsqrt(jnp.sum(M, axis=0, keepdims=True))
        else:
            dis_lane = lane_t(dis)                           # faithful general path
        return dis * M * dis_lane

    # ---- linear_list1: Linear -> LeakyReLU(alpha) ----
    # TODO(synk): nn.Dropout (training mode) is not implemented; demo uses dropout=None.
    for _ in range(n_lin1):
        Wt, b = getp(), getp()
        x = dense(x, Wt, b, alpha)

    # ---- GNN blocks ----
    for _ in range(n_gnn):
        W1t, b1, W2t, th = getp(), getp(), getp(), getp()

        h = dense(x, W2t, None, None)                        # linear2(x), bias-free

        # Pairwise Euclidean distances via the Gram expansion
        # ||hi-hj||^2 = ||hi||^2 + ||hj||^2 - 2<hi,hj>  (MXU friendly).
        sq = jnp.sum(h * h, axis=-1, keepdims=True)          # (N,1)
        gram = jax.lax.dot_general(h, h, (((1,), (1,)), ((), ())),
                                   preferred_element_type=jnp.float32)
        dist2 = jnp.maximum(sq + lane_t(sq) - 2.0 * gram, 0.0)
        dist = jnp.sqrt(dist2 + 1e-10)
        S = jnp.exp(dist * (-1.0 / (2.0 * sigma)))           # learned graph (symmetric)

        L = laplacian(A, sym_adj) + a * laplacian(S, True)
        L = laplacian(L, sym_adj)

        # Poly applied directly to x: never materialize P = I + sum_i th_i L^(i+1).
        thet = jax.nn.sigmoid(th)                            # (1, k)
        k = thet.shape[1]
        v = x
        gx = x                                               # I @ x term
        for i in range(k):
            v = jnp.dot(L, v, preferred_element_type=jnp.float32)
            gx = gx + v * thet[:, i:i + 1]

        x = dense(gx, W1t, b1, alpha)                        # linear1 -> LeakyReLU

    # ---- linear_list2: Linear (no activation) ----
    for _ in range(n_lin2):
        Wt, b = getp(), getp()
        x = dense(x, Wt, b, None)

    # TODO(synk): for large batched deployments pack several graphs' outputs
    # along lanes so stores are >=128 lanes wide (out_dim=8 is a masked store).
    o_ref[...] = x.astype(o_ref.dtype)


# ------------------------------ host-side param packing ----------------------
def _pack_params(params):
    """Pack all weights/biases/thetas into one (R, 128) f32 buffer (1 DMA)."""
    mats, layout, off = [], [], 0

    def add(p):
        nonlocal off
        p = jnp.asarray(p, jnp.float32)
        if p.ndim == 1:
            p = p.reshape(1, -1)
        r, c = p.shape
        if c > _LANE:
            raise NotImplementedError("parameter wider than 128 lanes")  # TODO(synk)
        rpad = -(-r // _SUB) * _SUB
        buf = jnp.zeros((rpad, _LANE), jnp.float32).at[:r, :c].set(p)
        mats.append(buf)
        layout.append((off, r, c))
        off += rpad

    for W, b in params["lin1"]:
        add(W.T); add(b)
    for W1, b1, W2, theta in params["gnn"]:
        add(W1.T); add(b1); add(W2.T); add(theta)
    for W, b in params["lin2"]:
        add(W.T); add(b)
    if not mats:
        mats.append(jnp.zeros((_SUB, _LANE), jnp.float32))
    return jnp.concatenate(mats, axis=0), tuple(layout)


# ------------------------------ wrapper --------------------------------------
def model_forward(params, x, A, *, sigma=1.0, a=1.0, alpha=0.1,
                  assume_symmetric_A=True):
    """Forward pass. x: (N, D) or (B, N, D); A: (N, N) or (B, N, N).

    assume_symmetric_A=True uses the cheaper column-sum Laplacian path (exact
    for symmetric adjacency, the usual GCN case); set False for asymmetric A.
    """
    x = jnp.asarray(x, jnp.float32)
    A = jnp.asarray(A, jnp.float32)

    single = (x.ndim == 2)
    if single:
        x = x[None]
    if A.ndim == 2:
        A = jnp.broadcast_to(A, (x.shape[0],) + A.shape)

    B, N, Din = x.shape
    pbuf, layout = _pack_params(params)
    R = pbuf.shape[0]

    if params["lin2"]:
        out_dim = params["lin2"][-1][0].shape[0]
    elif params["gnn"]:
        out_dim = params["gnn"][-1][0].shape[0]
    elif params["lin1"]:
        out_dim = params["lin1"][-1][0].shape[0]
    else:
        out_dim = Din

    kernel = functools.partial(
        _model_kernel, layout=layout,
        n_lin1=len(params["lin1"]), n_gnn=len(params["gnn"]),
        n_lin2=len(params["lin2"]),
        sigma=float(sigma), a=float(a), alpha=float(alpha),
        sym_adj=bool(assume_symmetric_A))

    # TODO(synk): for large N, tile the Laplacian / propagation over row blocks
    # (budget ~24-32*N^2 bytes of (N,N) state; v7x has 64 MiB VMEM vs 128 MiB
    # on v5e/v6e) and cast matmul inputs to bf16 on v5e.
    out = pl.pallas_call(
        kernel,
        out_shape=jax.ShapeDtypeStruct((B, N, out_dim), jnp.float32),
        grid=(B,),
        in_specs=[
            pl.BlockSpec((None, N, Din), lambda b: (b, 0, 0)),
            pl.BlockSpec((None, N, N), lambda b: (b, 0, 0)),
            # Constant block index -> packed params are DMA'd once and reused.
            pl.BlockSpec((R, _LANE), lambda b: (0, 0)),
        ],
        out_specs=pl.BlockSpec((None, N, out_dim), lambda b: (b, 0, 0)),
        compiler_params=pltpu.CompilerParams(
            dimension_semantics=("parallel",),
            vmem_limit_bytes=32 * 1024 * 1024),
    )(x, A, pbuf)

    if single:
        out = out[0]
    penalty_term = []
    return out, penalty_term


# ------------------------------ parameters -----------------------------------
def _init_linear(key, in_dim, out_dim, bias=True):
    kw, kb = jax.random.split(key)
    bound = 1.0 / (in_dim ** 0.5)                    # PyTorch nn.Linear init
    W = jax.random.uniform(kw, (out_dim, in_dim), jnp.float32, -bound, bound)
    b = (jax.random.uniform(kb, (1, out_dim), jnp.float32, -bound, bound)
         if bias else None)
    return W, b


def init_model(key, linear_list1, linear_list2, gnn_list, k=2):
    params = {"lin1": [], "lin2": [], "gnn": []}
    for i in range(len(linear_list1) - 1):
        key, sk = jax.random.split(key)
        params["lin1"].append(_init_linear(sk, linear_list1[i], linear_list1[i + 1]))
    for i in range(len(linear_list2) - 1):
        key, sk = jax.random.split(key)
        params["lin2"].append(_init_linear(sk, linear_list2[i], linear_list2[i + 1]))
    for i in range(len(gnn_list) - 1):
        key, k1, k2, k3 = jax.random.split(key, 4)
        W1, b1 = _init_linear(k1, gnn_list[i], gnn_list[i + 1])             # linear1
        W2, _ = _init_linear(k2, gnn_list[i], gnn_list[i + 1], bias=False)  # linear2
        theta = jax.random.normal(k3, (1, k), jnp.float32)
        params["gnn"].append((W1, b1, W2, theta))
    return params


# ------------------------------ pure-JAX reference ---------------------------
def reference_forward(params, x, A, *, sigma=1.0, a=1.0, alpha=0.1):
    """Single-graph reference matching the PyTorch module exactly."""
    hp = jax.lax.Precision.HIGHEST

    def mm(u, v):
        return jnp.dot(u, v, precision=hp)

    def leaky(v):
        return jnp.where(v >= 0.0, v, alpha * v)

    def lap(M):
        n = M.shape[0]
        I = jnp.eye(n, dtype=jnp.float32)
        d = jnp.sum(M, axis=-1, keepdims=True)
        D = (d ** -0.5) * I
        return mm(mm(D, M), D)

    x = jnp.asarray(x, jnp.float32)
    A = jnp.asarray(A, jnp.float32)
    for W, b in params["lin1"]:
        x = leaky(mm(x, W.T) + b)
    for W1, b1, W2, theta in params["gnn"]:
        h = mm(x, W2.T)
        ht = h.T                                       # (D, N)
        diff = ht[:, :, None] - ht[:, None, :]         # (D, N, N)
        dist = jnp.sqrt(jnp.sum(diff ** 2, axis=0) + 1e-10)
        S = jnp.exp(-dist / (2.0 * sigma))
        L = lap(A) + a * lap(S)
        L = lap(L)
        n = L.shape[0]
        I = jnp.eye(n, dtype=jnp.float32)
        thet = jax.nn.sigmoid(theta.reshape(-1))
        seg, P = I, I
        for i in range(thet.shape[0]):
            seg = mm(seg, L)
            P = P + seg * thet[i]
        x = leaky(mm(mm(P, x), W1.T) + b1)
    for W, b in params["lin2"]:
        x = mm(x, W.T) + b
    return x


# ------------------------------ demo ------------------------------------------
if __name__ == "__main__":
    key = jax.random.PRNGKey(0)
    kp, kx, ka = jax.random.split(key, 3)

    B = 4                         # batch of graphs (amortizes launch/DMA latency)
    N = 16                        # nodes per graph
    linear_list1 = [8, 32]
    gnn_list = [32, 32]
    linear_list2 = [32, 8]

    params = init_model(kp, linear_list1, linear_list2, gnn_list, k=2)
    x = jax.random.normal(kx, (B, N, linear_list1[0]), jnp.float32)
    A = jax.random.uniform(ka, (B, N, N), jnp.float32, minval=0.1, maxval=1.0)
    A = 0.5 * (A + jnp.swapaxes(A, -1, -2))    # symmetric, strictly positive adjacency

    out, penalty_term = model_forward(params, x, A)
    out = jax.block_until_ready(out)

    ref = jnp.stack([reference_forward(params, x[b], A[b]) for b in range(B)])

    assert out.shape == (B, N, linear_list2[-1]), out.shape
    assert bool(jnp.all(jnp.isfinite(out)))
    assert penalty_term == []
    assert bool(jnp.allclose(out, ref, rtol=2e-2, atol=2e-2)), (
        float(jnp.max(jnp.abs(out - ref))))

    # Single-graph call (original module signature) still works.
    out0, _ = model_forward(params, x[0], A[0])
    out0 = jax.block_until_ready(out0)
    assert out0.shape == (N, linear_list2[-1])
    assert bool(jnp.allclose(out0, ref[0], rtol=2e-2, atol=2e-2))

    print("KERNEL_OK")
</pallas_src>

<mosaic_0001>
module attributes {stable_mosaic.version = 11 : i64} {
  func.func @_model_kernel(%arg0: i32, %arg1: memref<1x16x8xf32, #tpu.memory_space<vmem>>, %arg2: memref<1x16x16xf32, #tpu.memory_space<vmem>>, %arg3: memref<136x128xf32, #tpu.memory_space<vmem>>, %arg4: memref<1x16x8xf32, #tpu.memory_space<vmem>>) attributes {dimension_semantics = [#tpu.dimension_semantics<parallel>], iteration_bounds = array<i64: 4>, scalar_prefetch = 0 : i64, scratch_operands = 0 : i64, tpu.core_type = #tpu.core_type<tc>, window_params = [{transform_indices = @transform_0, window_bounds = array<i64: 1, 16, 8>}, {transform_indices = @transform_1, window_bounds = array<i64: 1, 16, 16>}, {pipeline_mode = #tpu.pipeline_mode<synchronous>, transform_indices = @transform_2, window_bounds = array<i64: 136, 128>}, {transform_indices = @transform_3, window_bounds = array<i64: 1, 16, 8>}]} {
    %c0 = arith.constant 0 : index
    %c0_0 = arith.constant 0 : index
    %c0_1 = arith.constant 0 : index
    %0 = vector.load %arg1[%c0, %c0_0, %c0_1] : memref<1x16x8xf32, #tpu.memory_space<vmem>>, vector<1x16x8xf32>
    %1 = vector.shape_cast %0 : vector<1x16x8xf32> to vector<16x8xf32>
    %c0_2 = arith.constant 0 : index
    %c0_3 = arith.constant 0 : index
    %c0_4 = arith.constant 0 : index
    %2 = vector.load %arg2[%c0_2, %c0_3, %c0_4] : memref<1x16x16xf32, #tpu.memory_space<vmem>>, vector<1x16x16xf32>
    %3 = vector.shape_cast %2 : vector<1x16x16xf32> to vector<16x16xf32>
    %4 = tpu.iota {dimensions = array<i32: 0>} : vector<16x16xi32>
    %5 = tpu.iota {dimensions = array<i32: 1>} : vector<16x16xi32>
    %6 = arith.cmpi eq, %4, %5 : vector<16x16xi32>
    %7 = arith.extui %6 : vector<16x16xi1> to vector<16x16xi32>
    %8 = arith.sitofp %7 : vector<16x16xi32> to vector<16x16xf32>
    %c0_5 = arith.constant 0 : index
    %c0_6 = arith.constant 0 : index
    %9 = vector.load %arg3[%c0_5, %c0_6] : memref<136x128xf32, #tpu.memory_space<vmem>>, vector<8x32xf32>
    %c8 = arith.constant 8 : index
    %c0_7 = arith.constant 0 : index
    %10 = vector.load %arg3[%c8, %c0_7] : memref<136x128xf32, #tpu.memory_space<vmem>>, vector<1x32xf32>
    %cst = arith.constant dense<0.000000e+00> : vector<16x32xf32>
    %11 = tpu.matmul %1, %9, %cst {dimension_numbers = #tpu.dot_dimension_numbers<[1], [0], [0], [1], [0, 0, 1, 1], [], []>} : vector<16x8xf32>, vector<8x32xf32>, vector<16x32xf32> -> vector<16x32xf32>
    %12 = vector.broadcast %10 : vector<1x32xf32> to vector<16x32xf32>
    %13 = arith.addf %11, %12 : vector<16x32xf32>
    %cst_8 = arith.constant 0.000000e+00 : f32
    %14 = vector.broadcast %cst_8 : f32 to vector<16x32xf32>
    %15 = arith.cmpf oge, %13, %14 : vector<16x32xf32>
    %cst_9 = arith.constant 1.000000e-01 : f32
    %16 = vector.broadcast %cst_9 : f32 to vector<16x32xf32>
    %17 = arith.mulf %16, %13 : vector<16x32xf32>
    %18 = arith.select %15, %13, %17 : vector<16x32xi1>, vector<16x32xf32>
    %c16 = arith.constant 16 : index
    %c0_10 = arith.constant 0 : index
    %19 = vector.load %arg3[%c16, %c0_10] : memref<136x128xf32, #tpu.memory_space<vmem>>, vector<32x32xf32>
    %c48 = arith.constant 48 : index
    %c0_11 = arith.constant 0 : index
    %20 = vector.load %arg3[%c48, %c0_11] : memref<136x128xf32, #tpu.memory_space<vmem>>, vector<1x32xf32>
    %c56 = arith.constant 56 : index
    %c0_12 = arith.constant 0 : index
    %21 = vector.load %arg3[%c56, %c0_12] : memref<136x128xf32, #tpu.memory_space<vmem>>, vector<32x32xf32>
    %c88 = arith.constant 88 : index
    %c0_13 = arith.constant 0 : index
    %22 = vector.load %arg3[%c88, %c0_13] : memref<136x128xf32, #tpu.memory_space<vmem>>, vector<1x2xf32>
    %cst_14 = arith.constant dense<0.000000e+00> : vector<16x32xf32>
    %23 = tpu.matmul %18, %21, %cst_14 {dimension_numbers = #tpu.dot_dimension_numbers<[1], [0], [0], [1], [0, 0, 1, 1], [], []>} : vector<16x32xf32>, vector<32x32xf32>, vector<16x32xf32> -> vector<16x32xf32>
    %24 = arith.mulf %23, %23 : vector<16x32xf32>
    %cst_15 = arith.constant dense<0.000000e+00> : vector<16xf32>
    %25 = vector.multi_reduction <add>, %24, %cst_15 [1] : vector<16x32xf32> to vector<16xf32>
    %26 = vector.shape_cast %25 : vector<16xf32> to vector<16x1xf32>
    %cst_16 = arith.constant dense<0.000000e+00> : vector<16x16xf32>
    %27 = tpu.matmul %23, %23, %cst_16 {dimension_numbers = #tpu.dot_dimension_numbers<[1], [1], [0], [0], [0, 0, 1, 0], [], []>} : vector<16x32xf32>, vector<16x32xf32>, vector<16x16xf32> -> vector<16x16xf32>
    %28 = vector.broadcast %26 : vector<16x1xf32> to vector<16x16xf32>
    %29 = arith.mulf %28, %8 : vector<16x16xf32>
    %cst_17 = arith.constant dense<0.000000e+00> : vector<16xf32>
    %30 = vector.multi_reduction <add>, %29, %cst_17 [0] : vector<16x16xf32> to vector<16xf32>
    %31 = vector.shape_cast %30 : vector<16xf32> to vector<1x16xf32>
    %32 = vector.broadcast %26 : vector<16x1xf32> to vector<16x16xf32>
    %33 = vector.broadcast %31 : vector<1x16xf32> to vector<16x16xf32>
    %34 = arith.addf %32, %33 : vector<16x16xf32>
    %cst_18 = arith.constant 2.000000e+00 : f32
    %35 = vector.broadcast %cst_18 : f32 to vector<16x16xf32>
    %36 = arith.mulf %35, %27 : vector<16x16xf32>
    %37 = arith.subf %34, %36 : vector<16x16xf32>
    %cst_19 = arith.constant 0.000000e+00 : f32
    %38 = vector.broadcast %cst_19 : f32 to vector<16x16xf32>
    %39 = arith.maximumf %37, %38 : vector<16x16xf32>
    %cst_20 = arith.constant 1.000000e-10 : f32
    %40 = vector.broadcast %cst_20 : f32 to vector<16x16xf32>
    %41 = arith.addf %39, %40 : vector<16x16xf32>
    %42 = math.sqrt %41 : vector<16x16xf32>
    %cst_21 = arith.constant -5.000000e-01 : f32
    %43 = vector.broadcast %cst_21 : f32 to vector<16x16xf32>
    %44 = arith.mulf %42, %43 : vector<16x16xf32>
    %45 = math.exp %44 : vector<16x16xf32>
    %cst_22 = arith.constant dense<0.000000e+00> : vector<16xf32>
    %46 = vector.multi_reduction <add>, %3, %cst_22 [1] : vector<16x16xf32> to vector<16xf32>
    %47 = vector.shape_cast %46 : vector<16xf32> to vector<16x1xf32>
    %48 = math.rsqrt %47 : vector<16x1xf32>
    %cst_23 = arith.constant dense<0.000000e+00> : vector<16xf32>
    %49 = vector.multi_reduction <add>, %3, %cst_23 [0] : vector<16x16xf32> to vector<16xf32>
    %50 = vector.shape_cast %49 : vector<16xf32> to vector<1x16xf32>
    %51 = math.rsqrt %50 : vector<1x16xf32>
    %52 = vector.broadcast %48 : vector<16x1xf32> to vector<16x16xf32>
    %53 = arith.mulf %52, %3 : vector<16x16xf32>
    %54 = vector.broadcast %51 : vector<1x16xf32> to vector<16x16xf32>
    %55 = arith.mulf %53, %54 : vector<16x16xf32>
    %cst_24 = arith.constant dense<0.000000e+00> : vector<16xf32>
    %56 = vector.multi_reduction <add>, %45, %cst_24 [1] : vector<16x16xf32> to vector<16xf32>
    %57 = vector.shape_cast %56 : vector<16xf32> to vector<16x1xf32>
    %58 = math.rsqrt %57 : vector<16x1xf32>
    %cst_25 = arith.constant dense<0.000000e+00> : vector<16xf32>
    %59 = vector.multi_reduction <add>, %45, %cst_25 [0] : vector<16x16xf32> to vector<16xf32>
    %60 = vector.shape_cast %59 : vector<16xf32> to vector<1x16xf32>
    %61 = math.rsqrt %60 : vector<1x16xf32>
    %62 = vector.broadcast %58 : vector<16x1xf32> to vector<16x16xf32>
    %63 = arith.mulf %62, %45 : vector<16x16xf32>
    %64 = vector.broadcast %61 : vector<1x16xf32> to vector<16x16xf32>
    %65 = arith.mulf %63, %64 : vector<16x16xf32>
    %cst_26 = arith.constant 1.000000e+00 : f32
    %66 = vector.broadcast %cst_26 : f32 to vector<16x16xf32>
    %67 = arith.mulf %66, %65 : vector<16x16xf32>
    %68 = arith.addf %55, %67 : vector<16x16xf32>
    %cst_27 = arith.constant dense<0.000000e+00> : vector<16xf32>
    %69 = vector.multi_reduction <add>, %68, %cst_27 [1] : vector<16x16xf32> to vector<16xf32>
    %70 = vector.shape_cast %69 : vector<16xf32> to vector<16x1xf32>
    %71 = math.rsqrt %70 : vector<16x1xf32>
    %cst_28 = arith.constant dense<0.000000e+00> : vector<16xf32>
    %72 = vector.multi_reduction <add>, %68, %cst_28 [0] : vector<16x16xf32> to vector<16xf32>
    %73 = vector.shape_cast %72 : vector<16xf32> to vector<1x16xf32>
    %74 = math.rsqrt %73 : vector<1x16xf32>
    %75 = vector.broadcast %71 : vector<16x1xf32> to vector<16x16xf32>
    %76 = arith.mulf %75, %68 : vector<16x16xf32>
    %77 = vector.broadcast %74 : vector<1x16xf32> to vector<16x16xf32>
    %78 = arith.mulf %76, %77 : vector<16x16xf32>
    %79 = arith.negf %22 : vector<1x2xf32>
    %80 = math.exp %79 : vector<1x2xf32>
    %cst_29 = arith.constant 1.000000e+00 : f32
    %81 = vector.broadcast %cst_29 : f32 to vector<1x2xf32>
    %82 = arith.addf %81, %80 : vector<1x2xf32>
    %83 = arith.divf %81, %82 : vector<1x2xf32>
    %cst_30 = arith.constant dense<0.000000e+00> : vector<16x32xf32>
    %84 = tpu.matmul %78, %18, %cst_30 {dimension_numbers = #tpu.dot_dimension_numbers<[1], [0], [0], [1], [0, 0, 1, 1], [], []>} : vector<16x16xf32>, vector<16x32xf32>, vector<16x32xf32> -> vector<16x32xf32>
    %85 = vector.extract_strided_slice %83 {offsets = [0, 0], sizes = [1, 1], strides = [1, 1]} : vector<1x2xf32> to vector<1x1xf32>
    %86 = vector.broadcast %85 : vector<1x1xf32> to vector<16x32xf32>
    %87 = arith.mulf %84, %86 : vector<16x32xf32>
    %88 = arith.addf %18, %87 : vector<16x32xf32>
    %cst_31 = arith.constant dense<0.000000e+00> : vector<16x32xf32>
    %89 = tpu.matmul %78, %84, %cst_31 {dimension_numbers = #tpu.dot_dimension_numbers<[1], [0], [0], [1], [0, 0, 1, 1], [], []>} : vector<16x16xf32>, vector<16x32xf32>, vector<16x32xf32> -> vector<16x32xf32>
    %90 = vector.extract_strided_slice %83 {offsets = [0, 1], sizes = [1, 1], strides = [1, 1]} : vector<1x2xf32> to vector<1x1xf32>
    %91 = vector.broadcast %90 : vector<1x1xf32> to vector<16x32xf32>
    %92 = arith.mulf %89, %91 : vector<16x32xf32>
    %93 = arith.addf %88, %92 : vector<16x32xf32>
    %cst_32 = arith.constant dense<0.000000e+00> : vector<16x32xf32>
    %94 = tpu.matmul %93, %19, %cst_32 {dimension_numbers = #tpu.dot_dimension_numbers<[1], [0], [0], [1], [0, 0, 1, 1], [], []>} : vector<16x32xf32>, vector<32x32xf32>, vector<16x32xf32> -> vector<16x32xf32>
    %95 = vector.broadcast %20 : vector<1x32xf32> to vector<16x32xf32>
    %96 = arith.addf %94, %95 : vector<16x32xf32>
    %cst_33 = arith.constant 0.000000e+00 : f32
    %97 = vector.broadcast %cst_33 : f32 to vector<16x32xf32>
    %98 = arith.cmpf oge, %96, %97 : vector<16x32xf32>
    %cst_34 = arith.constant 1.000000e-01 : f32
    %99 = vector.broadcast %cst_34 : f32 to vector<16x32xf32>
    %100 = arith.mulf %99, %96 : vector<16x32xf32>
    %101 = arith.select %98, %96, %100 : vector<16x32xi1>, vector<16x32xf32>
    %c96 = arith.constant 96 : index
    %c0_35 = arith.constant 0 : index
    %102 = vector.load %arg3[%c96, %c0_35] : memref<136x128xf32, #tpu.memory_space<vmem>>, vector<32x8xf32>
    %c128 = arith.constant 128 : index
    %c0_36 = arith.constant 0 : index
    %103 = vector.load %arg3[%c128, %c0_36] : memref<136x128xf32, #tpu.memory_space<vmem>>, vector<1x8xf32>
    %cst_37 = arith.constant dense<0.000000e+00> : vector<16x8xf32>
    %104 = tpu.matmul %101, %102, %cst_37 {dimension_numbers = #tpu.dot_dimension_numbers<[1], [0], [0], [1], [0, 0, 1, 1], [], []>} : vector<16x32xf32>, vector<32x8xf32>, vector<16x8xf32> -> vector<16x8xf32>
    %105 = vector.broadcast %103 : vector<1x8xf32> to vector<16x8xf32>
    %106 = arith.addf %104, %105 : vector<16x8xf32>
    %c0_38 = arith.constant 0 : index
    %c0_39 = arith.constant 0 : index
    %c0_40 = arith.constant 0 : index
    %107 = vector.load %arg4[%c0_38, %c0_39, %c0_40] : memref<1x16x8xf32, #tpu.memory_space<vmem>>, vector<1x16x8xf32>
    %108 = vector.shape_cast %107 : vector<1x16x8xf32> to vector<16x8xf32>
    %109 = vector.shape_cast %106 : vector<16x8xf32> to vector<1x16x8xf32>
    tpu.vector_store %arg4[%c0_38, %c0_39, %c0_40], %109 {strides = array<i32>} : memref<1x16x8xf32, #tpu.memory_space<vmem>>, vector<1x16x8xf32>,
    return
  }
  func.func @transform_0(%arg0: i32) -> (i32, i32, i32) {
    %c0_i32 = arith.constant 0 : i32
    %c0_i32_0 = arith.constant 0 : i32
    %c0_i32_1 = arith.constant 0 : i32
    return %arg0, %c0_i32, %c0_i32_0 : i32, i32, i32
  }
  func.func @transform_1(%arg0: i32) -> (i32, i32, i32) {
    %c0_i32 = arith.constant 0 : i32
    %c0_i32_0 = arith.constant 0 : i32
    %c0_i32_1 = arith.constant 0 : i32
    return %arg0, %c0_i32, %c0_i32_0 : i32, i32, i32
  }
  func.func @transform_2(%arg0: i32) -> (i32, i32) {
    %c0_i32 = arith.constant 0 : i32
    %c0_i32_0 = arith.constant 0 : i32
    %c0_i32_1 = arith.constant 0 : i32
    return %c0_i32, %c0_i32_0 : i32, i32
  }
  func.func @transform_3(%arg0: i32) -> (i32, i32, i32) {
    %c0_i32 = arith.constant 0 : i32
    %c0_i32_0 = arith.constant 0 : i32
    %c0_i32_1 = arith.constant 0 : i32
    return %arg0, %c0_i32, %c0_i32_0 : i32, i32, i32
  }
}

</mosaic_0001>

<llo_original>
// kernel: tpu_custom_call.1
$region0: #{tpu_custom_call.1}
  #allocation0 [shape = 'u32[]', space=smem, size = 0x4, offset = 0x4, fixed_abs, tag = 'smem constant byte address 0x4 - core index']
  #allocation1 [shape = 'u32[144,128]{1,0:T(1,128)}', space=vmem, size = 0x12000, scoped, tag = 'internal scratch']
  %s0 = inlined_call_operand.vmem [shape: f32[4,16,8], index: 0, kind: input, shape index: {}]
  %s1 = inlined_call_operand.vmem [shape: f32[4,16,16], index: 1, kind: input, shape index: {}]
  %s2 = inlined_call_operand.hbm [shape: f32[136,128], index: 2, kind: input, shape index: {}]
  %s3 = inlined_call_operand.vmem [shape: f32[4,16,8], index: 3, kind: output, shape index: {}]
  %s4 = sld [smem:[#allocation0]]
  $region49: #{tpu_custom_call.1} parent=0
    _
  %s6 = ssub.s32 1, %s4
  %s7 = scalar_select 0, %s6, %s4
  $region1: #{tpu_custom_call.1} parent=0
    #allocation2 [shape = 'u8[69632]{0}', space=vmem, size = 0x11000, scoped, tag = 'input window, operand 2, single buffered']
    #allocation3 [shape = 's32[2]{0}', space=sflag, size = 0x8, scoped, tag = 'scoped memory for tpu_custom_call.1']
    %8 = vsyncpa [#allocation3], 0
    loop: start=0, step=1, limit=6
    $region2: #{tpu_custom_call.1} parent=1 // loop_pre_header
      _
    $region3: #{tpu_custom_call.1} parent=1 // loop_header
      %s10 = sphi 0, %s14
      %p11 = scmp.ge.s32.totalorder %s10, 6
      %s20 = sphi 0, %s22
      %s23 = sphi 0, %s20
      %s24 = sphi 0, %s23
      %s40 = sphi 0, %s24
      %s46 = sphi 0, %s48
      %s49 = sphi 0, %s46
      %s50 = sphi 0, %s49
      %s66 = sphi 0, %s50
      %s70 = sphi 0, %s70
      %s72 = sphi 0, %s70
      %s73 = sphi 0, %s72
      %s87 = sphi 0, %s73
      %s93 = sphi 0, %s95
      %s96 = sphi 0, %s93
      %s97 = sphi 0, %s96
      %s113 = sphi 0, %s97
    $region4: #{tpu_custom_call.1} parent=1 // loop_header_branch
      %13 = sbr.rel (%p11) target = $region8
    $region5: #{tpu_custom_call.1} parent=1 // loop_body
      %s15 = ssub.s32 %s10, 1
      %s16 = ssub.s32 %s10, 2
      %s17 = sadd.s32 %s10, 1
      %s18 = ssub.s32 %s10, %s17
      %p19 = scmp.eq.s32.totalorder %s18, 0
      %s21 = sadd.s32 %s20, 1
      %s22 = scalar_select %p19, %s20, %s21
      %p25 = pneg %p19
      %p26 = scmp.eq.s32.totalorder %s10, 3
      %p27 = por %p25, %p26
      %p28 = scmp.ne.s32.totalorder %s20, %s23
      %p29 = scmp.eq.s32.totalorder %s10, 0
      %p30 = por %p28, %p29
      %p31 = scmp.ne.s32.totalorder %s20, %s23
      %p32 = scmp.eq.s32.totalorder %s15, 3
      %p33 = por %p31, %p32
      %p34 = scmp.ne.s32.totalorder %s23, %s24
      %p35 = scmp.eq.s32.totalorder %s15, 0
      %p36 = por %p34, %p35
      %p37 = scmp.ne.s32.totalorder %s23, %s24
      %p38 = scmp.eq.s32.totalorder %s16, 3
      %p39 = por %p37, %p38
      %p41 = scmp.ne.s32.totalorder %s24, %s40
      %p42 = scmp.eq.s32.totalorder %s16, 0
      %p43 = por %p41, %p42
      %s44 = ssub.s32 %s10, %s17
      %p45 = scmp.eq.s32.totalorder %s44, 0
      %s47 = sadd.s32 %s46, 1
      %s48 = scalar_select %p45, %s46, %s47
      %p51 = pneg %p45
      %p52 = scmp.eq.s32.totalorder %s10, 3
      %p53 = por %p51, %p52
      %p54 = scmp.ne.s32.totalorder %s46, %s49
      %p55 = scmp.eq.s32.totalorder %s10, 0
      %p56 = por %p54, %p55
      %p57 = scmp.ne.s32.totalorder %s46, %s49
      %p58 = scmp.eq.s32.totalorder %s15, 3
      %p59 = por %p57, %p58
      %p60 = scmp.ne.s32.totalorder %s49, %s50
      %p61 = scmp.eq.s32.totalorder %s15, 0
      %p62 = por %p60, %p61
      %p63 = scmp.ne.s32.totalorder %s49, %s50
      %p64 = scmp.eq.s32.totalorder %s16, 3
      %p65 = por %p63, %p64
      %p67 = scmp.ne.s32.totalorder %s50, %s66
      %p68 = scmp.eq.s32.totalorder %s16, 0
      %p69 = por %p67, %p68
      %s71 = sadd.s32 %s70, 1
      %p74 = scmp.eq.s32.totalorder %s10, 3
      %p75 = scmp.ne.s32.totalorder %s70, %s72
      %p76 = scmp.eq.s32.totalorder %s10, 0
      %p77 = por %p75, %p76
      %p78 = scmp.ne.s32.totalorder %s70, %s72
      %p79 = scmp.eq.s32.totalorder %s15, 3
      %p80 = por %p78, %p79
      %p81 = scmp.ne.s32.totalorder %s72, %s73
      %p82 = scmp.eq.s32.totalorder %s15, 0
      %p83 = por %p81, %p82
      %p84 = scmp.ne.s32.totalorder %s72, %s73
      %p85 = scmp.eq.s32.totalorder %s16, 3
      %p86 = por %p84, %p85
      %p88 = scmp.ne.s32.totalorder %s73, %s87
      %p89 = scmp.eq.s32.totalorder %s16, 0
      %p90 = por %p88, %p89
      %s91 = ssub.s32 %s10, %s17
      %p92 = scmp.eq.s32.totalorder %s91, 0
      %s94 = sadd.s32 %s93, 1
      %s95 = scalar_select %p92, %s93, %s94
      %p98 = pneg %p92
      %p99 = scmp.eq.s32.totalorder %s10, 3
      %p100 = por %p98, %p99
      %p101 = scmp.ne.s32.totalorder %s93, %s96
      %p102 = scmp.eq.s32.totalorder %s10, 0
      %p103 = por %p101, %p102
      %p104 = scmp.ne.s32.totalorder %s93, %s96
      %p105 = scmp.eq.s32.totalorder %s15, 3
      %p106 = por %p104, %p105
      %p107 = scmp.ne.s32.totalorder %s96, %s97
      %p108 = scmp.eq.s32.totalorder %s15, 0
      %p109 = por %p107, %p108
      %p110 = scmp.ne.s32.totalorder %s96, %s97
      %p111 = scmp.eq.s32.totalorder %s16, 3
      %p112 = por %p110, %p111
      %p114 = scmp.ne.s32.totalorder %s97, %s113
      %p115 = scmp.eq.s32.totalorder %s16, 0
      %p116 = por %p114, %p115
      %p117 = scmp.le.s32.totalorder 1, %s10
      %p118 = scmp.lt.s32.totalorder %s10, 5
      %p119 = pnand %p117, %p118
      %p120 = pneg %p119
      // Predicated region
      $region9: #{tpu_custom_call.1} parent=5 // pred_check
        _
      $region10: #{tpu_custom_call.1} parent=5 // pred_check_branch
        %122 = sbr.rel (%p119) target = $region12
      $region11: #{tpu_custom_call.1} parent=5 // pred_region
        %s123 = ssub.s32 %s10, 1
        // Predicated region
        $region13: #{tpu_custom_call.1} parent=11 // pred_check
          %p124 = pneg %p83
        $region14: #{tpu_custom_call.1} parent=11 // pred_check_branch
          %126 = sbr.rel (%p124) target = $region16
        $region15: #{tpu_custom_call.1} parent=11 // pred_region
          %s128 = ssub.s32 2176, 2176
          %129 = vsyncadd [#allocation3], %s128
          %s130 = sshll.u32 [#allocation2], 4
          %s131 = int_to_ptr.vmem [resolvable:$true] %s130
          %136 = dma.hbm_to_vmem [thread:$0]  %s2, 2176, %s131, [#allocation3], 128, 128, 8
        $region16: #{tpu_custom_call.1} parent=11 // pred_fallthru
          _
      $region12: #{tpu_custom_call.1} parent=5 // pred_fallthru
        _
      %p137 = scmp.lt.s32.totalorder %s10, 4
      // Predicated region
      $region17: #{tpu_custom_call.1} parent=5 // pred_check
        %p138 = pneg %p137
      $region18: #{tpu_custom_call.1} parent=5 // pred_check_branch
        %140 = sbr.rel (%p138) target = $region20
      $region19: #{tpu_custom_call.1} parent=5 // pred_region
        // Predicated region
        $region21: #{tpu_custom_call.1} parent=19 // pred_check
          %p141 = pneg %p30
        $region22: #{tpu_custom_call.1} parent=19 // pred_check_branch
          %143 = sbr.rel (%p141) target = $region24
        $region23: #{tpu_custom_call.1} parent=19 // pred_region
          %p144 = scmp.lt.s32.totalorder %s10, 3
          %s145 = scalar_select %p144, %s10, 3
          %s146 = smul.addr %s145, 2
          %s147 = smul.addr %s146, 8
          %s148 = scalar_lea.vmem %s0, %s147
        $region24: #{tpu_custom_call.1} parent=19 // pred_fallthru
          _
        // Predicated region
        $region25: #{tpu_custom_call.1} parent=19 // pred_check
          %p149 = pneg %p56
        $region26: #{tpu_custom_call.1} parent=19 // pred_check_branch
          %151 = sbr.rel (%p149) target = $region28
        $region27: #{tpu_custom_call.1} parent=19 // pred_region
          %p152 = scmp.lt.s32.totalorder %s10, 3
          %s153 = scalar_select %p152, %s10, 3
          %s154 = smul.addr %s153, 2
          %s155 = smul.addr %s154, 8
          %s156 = scalar_lea.vmem %s1, %s155
        $region28: #{tpu_custom_call.1} parent=19 // pred_fallthru
          _
      $region20: #{tpu_custom_call.1} parent=5 // pred_fallthru
        _
      %p157 = scmp.le.s32.totalorder 1, %s10
      %p158 = scmp.lt.s32.totalorder %s10, 5
      %p159 = pnand %p157, %p158
      %p160 = pneg %p159
      // Predicated region
      $region29: #{tpu_custom_call.1} parent=5 // pred_check
        _
      $region30: #{tpu_custom_call.1} parent=5 // pred_check_branch
        %162 = sbr.rel (%p159) target = $region32
      $region31: #{tpu_custom_call.1} parent=5 // pred_region
        %s163 = ssub.s32 %s10, 1
        // Predicated region
        $region33: #{tpu_custom_call.1} parent=31 // pred_check
          %p164 = pneg %p83
        $region34: #{tpu_custom_call.1} parent=31 // pred_check_branch
          %166 = sbr.rel (%p164) target = $region36
        $region35: #{tpu_custom_call.1} parent=31 // pred_region
          %167 = dma.done [#allocation3], 2176
        $region36: #{tpu_custom_call.1} parent=31 // pred_fallthru
          _
        %p168 = scmp.lt.s32.totalorder %s15, 3
        %s169 = scalar_select %p168, %s15, 3
        %s170 = smul.addr %s169, 2
        %s171 = smul.addr %s170, 8
        %s172 = scalar_lea.vmem %s0, %s171
        %p173 = pneg %p36
        %p174 = pneg %p33
        %p175 = scmp.lt.s32.totalorder %s15, 3
        %s176 = scalar_select %p175, %s15, 3
        %s177 = smul.addr %s176, 2
        %s178 = smul.addr %s177, 8
        %s179 = scalar_lea.vmem %s1, %s178
        %p180 = pneg %p62
        %p181 = pneg %p59
        %p182 = pneg %p83
        %p183 = pneg %p80
        %p184 = pneg %p109
        %p185 = pneg %p106
        %p186 = scmp.lt.s32.totalorder %s15, 3
        %s187 = scalar_select %p186, %s15, 3
        %s188 = smul.addr %s187, 2
        %s189 = smul.addr %s188, 8
        %s190 = scalar_lea.vmem %s3, %s189
        %p191 = scmp.lt.s32.totalorder %s15, 3
        %s192 = scalar_select %p191, %s15, 3
        %s193 = smul.addr %s192, 2
        %s194 = smul.addr %s193, 8
        %s195 = scalar_lea.vmem %s0, %s194
        %p196 = scmp.lt.s32.totalorder %s15, 3
        %s197 = scalar_select %p196, %s15, 3
        %s198 = smul.addr %s197, 2
        %s199 = smul.addr %s198, 8
        %s200 = scalar_lea.vmem %s1, %s199
        %p201 = scmp.lt.s32.totalorder %s15, 3
        %s202 = scalar_select %p201, %s15, 3
        %s203 = smul.addr %s202, 2
        %s204 = smul.addr %s203, 8
        %s205 = scalar_lea.vmem %s3, %s204
        %v206 = vld [vmem:[%s195] sm:$0xff]
        %v207 = vld [vmem:[%s195 + $0x8] sm:$0xff]
        %v208 = vld [vmem:[%s200] sm:$0xff]
        %v209 = vld [vmem:[%s200 + $0x8] sm:$0xff]
        %v210 = vlaneseq
        %v211 = vshrl.u32 %v210, 7
        %v212 = vadd.s32 %v211, 8
        %v213 = vlaneseq
        %v214 = vand.u32 %v213, 127
        %vm215 = vcmp.eq.s32.totalorder %v211, %v214
        %vm216 = vcmp.eq.s32.totalorder %v212, %v214
        %v217 = vsel %vm215, 1, 0
        %v218 = vsel %vm216, 1, 0
        %v219 = vcvt.s32.f32 %v217
        %v220 = vcvt.s32.f32 %v218
        %v221 = vld [vmem:[#allocation2] sm:$0xff]
        %v222 = vld [vmem:[#allocation2 + $0x8] sm:$0x1]
        %v223 = vlaneseq
        %v224 = vshrl.u32 %v223, 7
        %v225 = vsub.s32 0, %v224
        %v226 = vrot.slane %v222, %v225
        %vm227 = vcmask 64512
        %v229 = vsel %vm227, %v206, 0
        %v232 = vsel %vm227, %v207, 0
        %234 = vmatprep.subr.mxu0 0.0
        %235 = vmatpush1.msra.mxu0 0.0
        %236 = vmatprep.subr.mxu0 0.0
        %237 = vmatpush1.msra.mxu0 0.0
        %238 = vmatprep.subr.mxu0 0.0
        %239 = vmatpush1.msra.mxu0 0.0
        %240 = vmatprep.subr.mxu0 0.0
        %241 = vmatpush1.msra.mxu0 0.0
        %242 = vmatprep.subr.mxu0 0.0
        %243 = vmatpush1.msra.mxu0 0.0
        %244 = vmatprep.subr.mxu0 0.0
        %245 = vmatpush1.msra.mxu0 0.0
        %246 = vmatprep.subr.mxu0 0.0
        %247 = vmatpush1.msra.mxu0 0.0
        %248 = vmatprep.subr.mxu0 0.0
        %249 = vmatpush1.msra.mxu0 0.0
        %250 = vmatprep.subr.mxu0 0.0
        %251 = vmatpush1.msra.mxu0 0.0
        %252 = vmatprep.subr.mxu0 0.0
        %253 = vmatpush1.msra.mxu0 0.0
        %254 = vmatprep.subr.mxu0 0.0
        %255 = vmatpush1.msra.mxu0 0.0
        %256 = vmatprep.subr.mxu0 0.0
        %257 = vmatpush1.msra.mxu0 0.0
        %258 = vmatprep.subr.mxu0 0.0
        %259 = vmatpush1.msra.mxu0 0.0
        %260 = vmatprep.subr.mxu0 0.0
        %261 = vmatpush1.msra.mxu0 0.0
        %262 = vmatprep.subr.mxu0 0.0
        %263 = vmatpush1.msra.mxu0 0.0
        %264 = vmatprep.subr.mxu0 0.0
        %265 = vmatpush1.msra.mxu0 %v221
        %266 = vmatprep.subr.mxu0 0.0
        %267 = vmatpush2.msra.mxu0 0.0
        %268 = vmatprep.subr.mxu0 0.0
        %269 = vmatpush2.msra.mxu0 0.0
        %270 = vmatprep.subr.mxu0 0.0
        %271 = vmatpush2.msra.mxu0 0.0
        %272 = vmatprep.subr.mxu0 0.0
        %273 = vmatpush2.msra.mxu0 0.0
        %274 = vmatprep.subr.mxu0 0.0
        %275 = vmatpush2.msra.mxu0 0.0
        %276 = vmatprep.subr.mxu0 0.0
        %277 = vmatpush2.msra.mxu0 0.0
        %278 = vmatprep.subr.mxu0 0.0
        %279 = vmatpush2.msra.mxu0 0.0
        %280 = vmatprep.subr.mxu0 0.0
        %281 = vmatpush2.msra.mxu0 0.0
        %282 = vmatprep.subr.mxu0 0.0
        %283 = vmatpush2.msra.mxu0 0.0
        %284 = vmatprep.subr.mxu0 0.0
        %285 = vmatpush2.msra.mxu0 0.0
        %286 = vmatprep.subr.mxu0 0.0
        %287 = vmatpush2.msra.mxu0 0.0
        %288 = vmatprep.subr.mxu0 0.0
        %289 = vmatpush2.msra.mxu0 0.0
        %290 = vmatprep.subr.mxu0 0.0
        %291 = vmatpush2.msra.mxu0 0.0
        %292 = vmatprep.subr.mxu0 0.0
        %293 = vmatpush2.msra.mxu0 0.0
        %294 = vmatprep.subr.mxu0 0.0
        %295 = vmatpush2.msra.mxu0 0.0
        %296 = vmatprep.subr.mxu0 0.0
        %297 = vmatpush2.msra.mxu0 0.0
        %298 = vmatprep.mubr.f32.mxu0 0.0
        %299 = vmatmul.mubr.f32.gmra.mxu0 %v229
        %v300 = vpop.f32.mrf.mxu0
        %v301 = vadd.f32 %v226, %v300
        %v302 = vpop.f32.mrf.mxu0
        %303 = vmatprep.mubr.f32.mxu0 0.0
        %304 = vmatmul.mubr.f32.gmra.mxu0 %v232
        %v305 = vpop.f32.mrf.mxu0
        %v306 = vadd.f32 %v226, %v305
        %v307 = vpop.f32.mrf.mxu0
        %308 = vdwg.mxu0
        %vm309 = vcmp.ge.f32.partialorder %v301, 0.0
        %vm310 = vcmp.ge.f32.partialorder %v306, 0.0
        %v311 = vmul.f32 %v301, 0.1
        %v312 = vmul.f32 %v306, 0.1
        %v313 = vsel %vm309, %v301, %v311
        %v314 = vsel %vm310, %v306, %v312
        %v315 = vld [vmem:[#allocation2 + $0x10] sm:$0xff]
        %v316 = vld [vmem:[#allocation2 + $0x18] sm:$0xff]
        %v317 = vld [vmem:[#allocation2 + $0x20] sm:$0xff]
        %v318 = vld [vmem:[#allocation2 + $0x28] sm:$0xff]
        %v319 = vld [vmem:[#allocation2 + $0x30] sm:$0x1]
        %v320 = vld [vmem:[#allocation2 + $0x38] sm:$0xff]
        %v321 = vld [vmem:[#allocation2 + $0x40] sm:$0xff]
        %v322 = vld [vmem:[#allocation2 + $0x48] sm:$0xff]
        %v323 = vld [vmem:[#allocation2 + $0x50] sm:$0xff]
        %v324 = vld [vmem:[#allocation2 + $0x58] sm:$0x1]
        %vm325 = vcmask 261120
        %v327 = vsel %vm325, %v313, 0
        %v330 = vsel %vm325, %v314, 0
        %332 = vmatprep.subr.mxu0 0.0
        %333 = vmatpush1.msra.mxu0 0.0
        %334 = vmatprep.subr.mxu0 0.0
        %335 = vmatpush1.msra.mxu0 0.0
        %336 = vmatprep.subr.mxu0 0.0
        %337 = vmatpush1.msra.mxu0 0.0
        %338 = vmatprep.subr.mxu0 0.0
        %339 = vmatpush1.msra.mxu0 0.0
        %340 = vmatprep.subr.mxu0 0.0
        %341 = vmatpush1.msra.mxu0 0.0
        %342 = vmatprep.subr.mxu0 0.0
        %343 = vmatpush1.msra.mxu0 0.0
        %344 = vmatprep.subr.mxu0 0.0
        %345 = vmatpush1.msra.mxu0 0.0
        %346 = vmatprep.subr.mxu0 0.0
        %347 = vmatpush1.msra.mxu0 0.0
        %348 = vmatprep.subr.mxu0 0.0
        %349 = vmatpush1.msra.mxu0 0.0
        %350 = vmatprep.subr.mxu0 0.0
        %351 = vmatpush1.msra.mxu0 0.0
        %352 = vmatprep.subr.mxu0 0.0
        %353 = vmatpush1.msra.mxu0 0.0
        %354 = vmatprep.subr.mxu0 0.0
        %355 = vmatpush1.msra.mxu0 0.0
        %356 = vmatprep.subr.mxu0 0.0
        %357 = vmatpush1.msra.mxu0 %v323
        %358 = vmatprep.subr.mxu0 0.0
        %359 = vmatpush1.msra.mxu0 %v322
        %360 = vmatprep.subr.mxu0 0.0
        %361 = vmatpush1.msra.mxu0 %v321
        %362 = vmatprep.subr.mxu0 0.0
        %363 = vmatpush1.msra.mxu0 %v320
        %364 = vmatprep.subr.mxu0 0.0
        %365 = vmatpush2.msra.mxu0 0.0
        %366 = vmatprep.subr.mxu0 0.0
        %367 = vmatpush2.msra.mxu0 0.0
        %368 = vmatprep.subr.mxu0 0.0
        %369 = vmatpush2.msra.mxu0 0.0
        %370 = vmatprep.subr.mxu0 0.0
        %371 = vmatpush2.msra.mxu0 0.0
        %372 = vmatprep.subr.mxu0 0.0
        %373 = vmatpush2.msra.mxu0 0.0
        %374 = vmatprep.subr.mxu0 0.0
        %375 = vmatpush2.msra.mxu0 0.0
        %376 = vmatprep.subr.mxu0 0.0
        %377 = vmatpush2.msra.mxu0 0.0
        %378 = vmatprep.subr.mxu0 0.0
        %379 = vmatpush2.msra.mxu0 0.0
        %380 = vmatprep.subr.mxu0 0.0
        %381 = vmatpush2.msra.mxu0 0.0
        %382 = vmatprep.subr.mxu0 0.0
        %383 = vmatpush2.msra.mxu0 0.0
        %384 = vmatprep.subr.mxu0 0.0
        %385 = vmatpush2.msra.mxu0 0.0
        %386 = vmatprep.subr.mxu0 0.0
        %387 = vmatpush2.msra.mxu0 0.0
        %388 = vmatprep.subr.mxu0 0.0
        %389 = vmatpush2.msra.mxu0 0.0
        %390 = vmatprep.subr.mxu0 0.0
        %391 = vmatpush2.msra.mxu0 0.0
        %392 = vmatprep.subr.mxu0 0.0
        %393 = vmatpush2.msra.mxu0 0.0
        %394 = vmatprep.subr.mxu0 0.0
        %395 = vmatpush2.msra.mxu0 0.0
        %396 = vmatprep.mubr.f32.mxu0 0.0
        %397 = vmatmul.mubr.f32.gmra.mxu0 %v327
        %v398 = vpop.f32.mrf.mxu0
        %v399 = vadd.f32 0.0, %v398
        %v400 = vpop.f32.mrf.mxu0
        %401 = vmatprep.mubr.f32.mxu0 0.0
        %402 = vmatmul.mubr.f32.gmra.mxu0 %v330
        %v403 = vpop.f32.mrf.mxu0
        %v404 = vadd.f32 0.0, %v403
        %v405 = vpop.f32.mrf.mxu0
        %406 = vdwg.mxu0
        %v407 = vmul.f32 %v399, %v399
        %v408 = vmul.f32 %v404, %v404
        %v409 = vsel %vm325, %v407, 0.0
        %410 = vadd.xlane.f32.xlu0 %v409
        %v411 = vpop.xlane.xlu0 %410
        %v412 = vsel %vm325, %v408, 0.0
        %413 = vadd.xlane.f32.xlu0 %v412
        %v414 = vpop.xlane.xlu0 %413
        %v416 = vsel %vm325, %v399, 0
        %v419 = vsel %vm325, %v404, 0
        %421 = vmatprep.subr.mxu0 0.0
        %422 = vmatpush1.xpose.msra.mxu0 0.0
        %423 = vmatprep.subr.mxu0 0.0
        %424 = vmatpush1.xpose.msra.mxu0 0.0
        %425 = vmatprep.subr.mxu0 0.0
        %426 = vmatpush1.xpose.msra.mxu0 0.0
        %427 = vmatprep.subr.mxu0 0.0
        %428 = vmatpush1.xpose.msra.mxu0 0.0
        %429 = vmatprep.subr.mxu0 0.0
        %430 = vmatpush1.xpose.msra.mxu0 0.0
        %431 = vmatprep.subr.mxu0 0.0
        %432 = vmatpush1.xpose.msra.mxu0 0.0
        %433 = vmatprep.subr.mxu0 0.0
        %434 = vmatpush1.xpose.msra.mxu0 0.0
        %435 = vmatprep.subr.mxu0 0.0
        %436 = vmatpush1.xpose.msra.mxu0 0.0
        %437 = vmatprep.subr.mxu0 0.0
        %438 = vmatpush1.xpose.msra.mxu0 0.0
        %439 = vmatprep.subr.mxu0 0.0
        %440 = vmatpush1.xpose.msra.mxu0 0.0
        %441 = vmatprep.subr.mxu0 0.0
        %442 = vmatpush1.xpose.msra.mxu0 0.0
        %443 = vmatprep.subr.mxu0 0.0
        %444 = vmatpush1.xpose.msra.mxu0 0.0
        %445 = vmatprep.subr.mxu0 0.0
        %446 = vmatpush1.xpose.msra.mxu0 0.0
        %447 = vmatprep.subr.mxu0 0.0
        %448 = vmatpush1.xpose.msra.mxu0 0.0
        %449 = vmatprep.subr.mxu0 0.0
        %450 = vmatpush1.xpose.msra.mxu0 %v419
        %451 = vmatprep.subr.mxu0 0.0
        %452 = vmatpush1.xpose.msra.mxu0 %v416
        %453 = vmatprep.subr.mxu0 0.0
        %454 = vmatpush2.xpose.msra.mxu0 0.0
        %455 = vmatprep.subr.mxu0 0.0
        %456 = vmatpush2.xpose.msra.mxu0 0.0
        %457 = vmatprep.subr.mxu0 0.0
        %458 = vmatpush2.xpose.msra.mxu0 0.0
        %459 = vmatprep.subr.mxu0 0.0
        %460 = vmatpush2.xpose.msra.mxu0 0.0
        %461 = vmatprep.subr.mxu0 0.0
        %462 = vmatpush2.xpose.msra.mxu0 0.0
        %463 = vmatprep.subr.mxu0 0.0
        %464 = vmatpush2.xpose.msra.mxu0 0.0
        %465 = vmatprep.subr.mxu0 0.0
        %466 = vmatpush2.xpose.msra.mxu0 0.0
        %467 = vmatprep.subr.mxu0 0.0
        %468 = vmatpush2.xpose.msra.mxu0 0.0
        %469 = vmatprep.subr.mxu0 0.0
        %470 = vmatpush2.xpose.msra.mxu0 0.0
        %471 = vmatprep.subr.mxu0 0.0
        %472 = vmatpush2.xpose.msra.mxu0 0.0
        %473 = vmatprep.subr.mxu0 0.0
        %474 = vmatpush2.xpose.msra.mxu0 0.0
        %475 = vmatprep.subr.mxu0 0.0
        %476 = vmatpush2.xpose.msra.mxu0 0.0
        %477 = vmatprep.subr.mxu0 0.0
        %478 = vmatpush2.xpose.msra.mxu0 0.0
        %479 = vmatprep.subr.mxu0 0.0
        %480 = vmatpush2.xpose.msra.mxu0 0.0
        %481 = vmatprep.subr.mxu0 0.0
        %482 = vmatpush2.xpose.msra.mxu0 0.0
        %483 = vmatprep.subr.mxu0 0.0
        %484 = vmatpush2.xpose.msra.mxu0 0.0
        %485 = vmatprep.mubr.f32.mxu0 0.0
        %486 = vmatmul.mubr.f32.gmra.mxu0 %v416
        %v487 = vpop.f32.mrf.mxu0
        %v488 = vadd.f32 0.0, %v487
        %v489 = vpop.f32.mrf.mxu0
        %490 = vmatprep.mubr.f32.mxu0 0.0
        %491 = vmatmul.mubr.f32.gmra.mxu0 %v419
        %v492 = vpop.f32.mrf.mxu0
        %v493 = vadd.f32 0.0, %v492
        %v494 = vpop.f32.mrf.mxu0
        %495 = vdwg.mxu0
        %v496 = vmul.f32 %v411, %v219
        %v497 = vmul.f32 %v414, %v220
        %vm498 = vcmask 130048
        %v499 = vsel %vm498, %v496, 0.0
        %v500 = vsel %vm498, %v497, 0.0
        %v501 = vadd.f32 %v499, %v500
        %v502 = vrot.slane %v501, 4
        %v503 = vadd.f32 %v501, %v502
        %v504 = vrot.slane %v503, 2
        %v505 = vadd.f32 %v503, %v504
        %v506 = vrot.slane %v505, 1
        %v507 = vadd.f32 %v505, %v506
        %v508 = vadd.f32 %v411, %v507
        %v509 = vadd.f32 %v414, %v507
        %v510 = vmul.f32 %v488, 2.0
        %v511 = vmul.f32 %v493, 2.0
        %v512 = vsub.f32 %v508, %v510
        %v513 = vsub.f32 %v509, %v511
        %v514 = vmax.f32 %v512, 0.0
        %v515 = vmax.f32 %v513, 0.0
        %v516 = vadd.f32 %v514, 1e-10
        %v517 = vadd.f32 %v515, 1e-10
        %v518 = vrsqrt.pop %v516
        %v519 = vmul.f32 %v516, %v518
        %vm520 = vcmp.eq.f32.partialorder %v516, inf
        %v521 = vsel %vm520, %v516, %v519
        %vm522 = vcmp.eq.f32.partialorder %v516, 0.0
        %v523 = vand.u32 %v516, 2147483648
        %v524 = vsel %vm522, %v523, %v521
        %v525 = vrsqrt.pop %v517
        %v526 = vmul.f32 %v517, %v525
        %vm527 = vcmp.eq.f32.partialorder %v517, inf
        %v528 = vsel %vm527, %v517, %v526
        %vm529 = vcmp.eq.f32.partialorder %v517, 0.0
        %v530 = vand.u32 %v517, 2147483648
        %v531 = vsel %vm529, %v530, %v528
        %v532 = vmul.f32 %v524, -0.5
        %v533 = vmul.f32 %v531, -0.5
        %v534 = vmul.f32 %v532, 1.442695
        %v535 = vpow.pop %v534
        %v536 = vmul.f32 %v533, 1.442695
        %v537 = vpow.pop %v536
        %v538 = vsel %vm498, %v208, 0.0
        %539 = vadd.xlane.f32.xlu0 %v538
        %v540 = vpop.xlane.xlu0 %539
        %v541 = vsel %vm498, %v209, 0.0
        %542 = vadd.xlane.f32.xlu0 %v541
        %v543 = vpop.xlane.xlu0 %542
        %v544 = vrsqrt.pop %v540
        %v545 = vrsqrt.pop %v543
        %v546 = vadd.f32 %v538, %v541
        %v547 = vrot.slane %v546, 4
        %v548 = vadd.f32 %v546, %v547
        %v549 = vrot.slane %v548, 2
        %v550 = vadd.f32 %v548, %v549
        %v551 = vrot.slane %v550, 1
        %v552 = vadd.f32 %v550, %v551
        %v553 = vrsqrt.pop %v552
        %v554 = vmul.f32 %v544, %v208
        %v555 = vmul.f32 %v545, %v209
        %v556 = vmul.f32 %v554, %v553
        %v557 = vmul.f32 %v555, %v553
        %v558 = vsel %vm498, %v535, 0.0
        %559 = vadd.xlane.f32.xlu0 %v558
        %v560 = vpop.xlane.xlu0 %559
        %v561 = vsel %vm498, %v537, 0.0
        %562 = vadd.xlane.f32.xlu0 %v561
        %v563 = vpop.xlane.xlu0 %562
        %v564 = vrsqrt.pop %v560
        %v565 = vrsqrt.pop %v563
        %v566 = vadd.f32 %v558, %v561
        %v567 = vrot.slane %v566, 4
        %v568 = vadd.f32 %v566, %v567
        %v569 = vrot.slane %v568, 2
        %v570 = vadd.f32 %v568, %v569
        %v571 = vrot.slane %v570, 1
        %v572 = vadd.f32 %v570, %v571
        %v573 = vrsqrt.pop %v572
        %v574 = vmul.f32 %v564, %v535
        %v575 = vmul.f32 %v565, %v537
        %v576 = vmul.f32 %v574, %v573
        %v577 = vmul.f32 %v575, %v573
        %v578 = vadd.f32 %v556, %v576
        %v579 = vadd.f32 %v557, %v577
        %v580 = vsel %vm498, %v578, 0.0
        %581 = vadd.xlane.f32.xlu0 %v580
        %v582 = vpop.xlane.xlu0 %581
        %v583 = vsel %vm498, %v579, 0.0
        %584 = vadd.xlane.f32.xlu0 %v583
        %v585 = vpop.xlane.xlu0 %584
        %v586 = vrsqrt.pop %v582
        %v587 = vrsqrt.pop %v585
        %v588 = vadd.f32 %v580, %v583
        %v589 = vrot.slane %v588, 4
        %v590 = vadd.f32 %v588, %v589
        %v591 = vrot.slane %v590, 2
        %v592 = vadd.f32 %v590, %v591
        %v593 = vrot.slane %v592, 1
        %v594 = vadd.f32 %v592, %v593
        %v595 = vrsqrt.pop %v594
        %v596 = vmul.f32 %v586, %v578
        %v597 = vmul.f32 %v587, %v579
        %v598 = vmul.f32 %v596, %v595
        %v599 = vmul.f32 %v597, %v595
        %v600 = vxor.u32 %v324, 2147483648
        %v601 = vmul.f32 %v600, 1.442695
        %v602 = vpow.pop %v601
        %v603 = vadd.f32 %v602, 1.0
        %v604 = vrcp.pop %v603
        %v605 = vmul.f32 1.0, %v604
        %v607 = vsel %vm498, %v598, 0
        %v610 = vsel %vm498, %v599, 0
        %612 = vmatprep.subr.mxu0 0.0
        %613 = vmatpush1.msra.mxu0 0.0
        %614 = vmatprep.subr.mxu0 0.0
        %615 = vmatpush1.msra.mxu0 0.0
        %616 = vmatprep.subr.mxu0 0.0
        %617 = vmatpush1.msra.mxu0 0.0
        %618 = vmatprep.subr.mxu0 0.0
        %619 = vmatpush1.msra.mxu0 0.0
        %620 = vmatprep.subr.mxu0 0.0
        %621 = vmatpush1.msra.mxu0 0.0
        %622 = vmatprep.subr.mxu0 0.0
        %623 = vmatpush1.msra.mxu0 0.0
        %624 = vmatprep.subr.mxu0 0.0
        %625 = vmatpush1.msra.mxu0 0.0
        %626 = vmatprep.subr.mxu0 0.0
        %627 = vmatpush1.msra.mxu0 0.0
        %628 = vmatprep.subr.mxu0 0.0
        %629 = vmatpush1.msra.mxu0 0.0
        %630 = vmatprep.subr.mxu0 0.0
        %631 = vmatpush1.msra.mxu0 0.0
        %632 = vmatprep.subr.mxu0 0.0
        %633 = vmatpush1.msra.mxu0 0.0
        %634 = vmatprep.subr.mxu0 0.0
        %635 = vmatpush1.msra.mxu0 0.0
        %636 = vmatprep.subr.mxu0 0.0
        %637 = vmatpush1.msra.mxu0 0.0
        %638 = vmatprep.subr.mxu0 0.0
        %639 = vmatpush1.msra.mxu0 0.0
        %640 = vmatprep.subr.mxu0 0.0
        %641 = vmatpush1.msra.mxu0 %v314
        %642 = vmatprep.subr.mxu0 0.0
        %643 = vmatpush1.msra.mxu0 %v313
        %644 = vmatprep.subr.mxu0 0.0
        %645 = vmatpush2.msra.mxu0 0.0
        %646 = vmatprep.subr.mxu0 0.0
        %647 = vmatpush2.msra.mxu0 0.0
        %648 = vmatprep.subr.mxu0 0.0
        %649 = vmatpush2.msra.mxu0 0.0
        %650 = vmatprep.subr.mxu0 0.0
        %651 = vmatpush2.msra.mxu0 0.0
        %652 = vmatprep.subr.mxu0 0.0
        %653 = vmatpush2.msra.mxu0 0.0
        %654 = vmatprep.subr.mxu0 0.0
        %655 = vmatpush2.msra.mxu0 0.0
        %656 = vmatprep.subr.mxu0 0.0
        %657 = vmatpush2.msra.mxu0 0.0
        %658 = vmatprep.subr.mxu0 0.0
        %659 = vmatpush2.msra.mxu0 0.0
        %660 = vmatprep.subr.mxu0 0.0
        %661 = vmatpush2.msra.mxu0 0.0
        %662 = vmatprep.subr.mxu0 0.0
        %663 = vmatpush2.msra.mxu0 0.0
        %664 = vmatprep.subr.mxu0 0.0
        %665 = vmatpush2.msra.mxu0 0.0
        %666 = vmatprep.subr.mxu0 0.0
        %667 = vmatpush2.msra.mxu0 0.0
        %668 = vmatprep.subr.mxu0 0.0
        %669 = vmatpush2.msra.mxu0 0.0
        %670 = vmatprep.subr.mxu0 0.0
        %671 = vmatpush2.msra.mxu0 0.0
        %672 = vmatprep.subr.mxu0 0.0
        %673 = vmatpush2.msra.mxu0 0.0
        %674 = vmatprep.subr.mxu0 0.0
        %675 = vmatpush2.msra.mxu0 0.0
        %676 = vmatprep.mubr.f32.mxu0 0.0
        %677 = vmatmul.mubr.f32.gmra.mxu0 %v607
        %v678 = vpop.f32.mrf.mxu0
        %v679 = vadd.f32 0.0, %v678
        %v680 = vpop.f32.mrf.mxu0
        %681 = vmatprep.mubr.f32.mxu0 0.0
        %682 = vmatmul.mubr.f32.gmra.mxu0 %v610
        %v683 = vpop.f32.mrf.mxu0
        %v684 = vadd.f32 0.0, %v683
        %v685 = vpop.f32.mrf.mxu0
        %686 = vdwg.mxu0
        %s688 = vtos %v605
        %v689 = vstv %s688
        %v691 = vmul.f32 %v679, %v689
        %v692 = vmul.f32 %v684, %v689
        %v693 = vadd.f32 %v313, %v691
        %v694 = vadd.f32 %v314, %v692
        %695 = vmatprep.subr.mxu0 0.0
        %696 = vmatpush1.msra.mxu0 0.0
        %697 = vmatprep.subr.mxu0 0.0
        %698 = vmatpush1.msra.mxu0 0.0
        %699 = vmatprep.subr.mxu0 0.0
        %700 = vmatpush1.msra.mxu0 0.0
        %701 = vmatprep.subr.mxu0 0.0
        %702 = vmatpush1.msra.mxu0 0.0
        %703 = vmatprep.subr.mxu0 0.0
        %704 = vmatpush1.msra.mxu0 0.0
        %705 = vmatprep.subr.mxu0 0.0
        %706 = vmatpush1.msra.mxu0 0.0
        %707 = vmatprep.subr.mxu0 0.0
        %708 = vmatpush1.msra.mxu0 0.0
        %709 = vmatprep.subr.mxu0 0.0
        %710 = vmatpush1.msra.mxu0 0.0
        %711 = vmatprep.subr.mxu0 0.0
        %712 = vmatpush1.msra.mxu0 0.0
        %713 = vmatprep.subr.mxu0 0.0
        %714 = vmatpush1.msra.mxu0 0.0
        %715 = vmatprep.subr.mxu0 0.0
        %716 = vmatpush1.msra.mxu0 0.0
        %717 = vmatprep.subr.mxu0 0.0
        %718 = vmatpush1.msra.mxu0 0.0
        %719 = vmatprep.subr.mxu0 0.0
        %720 = vmatpush1.msra.mxu0 0.0
        %721 = vmatprep.subr.mxu0 0.0
        %722 = vmatpush1.msra.mxu0 0.0
        %723 = vmatprep.subr.mxu0 0.0
        %724 = vmatpush1.msra.mxu0 %v684
        %725 = vmatprep.subr.mxu0 0.0
        %726 = vmatpush1.msra.mxu0 %v679
        %727 = vmatprep.subr.mxu0 0.0
        %728 = vmatpush2.msra.mxu0 0.0
        %729 = vmatprep.subr.mxu0 0.0
        %730 = vmatpush2.msra.mxu0 0.0
        %731 = vmatprep.subr.mxu0 0.0
        %732 = vmatpush2.msra.mxu0 0.0
        %733 = vmatprep.subr.mxu0 0.0
        %734 = vmatpush2.msra.mxu0 0.0
        %735 = vmatprep.subr.mxu0 0.0
        %736 = vmatpush2.msra.mxu0 0.0
        %737 = vmatprep.subr.mxu0 0.0
        %738 = vmatpush2.msra.mxu0 0.0
        %739 = vmatprep.subr.mxu0 0.0
        %740 = vmatpush2.msra.mxu0 0.0
        %741 = vmatprep.subr.mxu0 0.0
        %742 = vmatpush2.msra.mxu0 0.0
        %743 = vmatprep.subr.mxu0 0.0
        %744 = vmatpush2.msra.mxu0 0.0
        %745 = vmatprep.subr.mxu0 0.0
        %746 = vmatpush2.msra.mxu0 0.0
        %747 = vmatprep.subr.mxu0 0.0
        %748 = vmatpush2.msra.mxu0 0.0
        %749 = vmatprep.subr.mxu0 0.0
        %750 = vmatpush2.msra.mxu0 0.0
        %751 = vmatprep.subr.mxu0 0.0
        %752 = vmatpush2.msra.mxu0 0.0
        %753 = vmatprep.subr.mxu0 0.0
        %754 = vmatpush2.msra.mxu0 0.0
        %755 = vmatprep.subr.mxu0 0.0
        %756 = vmatpush2.msra.mxu0 0.0
        %757 = vmatprep.subr.mxu0 0.0
        %758 = vmatpush2.msra.mxu0 0.0
        %759 = vmatprep.mubr.f32.mxu0 0.0
        %760 = vmatmul.mubr.f32.gmra.mxu0 %v607
        %v761 = vpop.f32.mrf.mxu0
        %v762 = vadd.f32 0.0, %v761
        %v763 = vpop.f32.mrf.mxu0
        %764 = vmatprep.mubr.f32.mxu0 0.0
        %765 = vmatmul.mubr.f32.gmra.mxu0 %v610
        %v766 = vpop.f32.mrf.mxu0
        %v767 = vadd.f32 0.0, %v766
        %v768 = vpop.f32.mrf.mxu0
        %769 = vdwg.mxu0
        %770 = vrot.lane.b32.xlu0 %v605, 127
        %v771 = vpop.permute.xlu0 %770
        %s772 = vtos %v771
        %v773 = vstv %s772
        %v775 = vmul.f32 %v762, %v773
        %v776 = vmul.f32 %v767, %v773
        %v777 = vadd.f32 %v693, %v775
        %v778 = vadd.f32 %v694, %v776
        %v779 = vlaneseq
        %v780 = vshrl.u32 %v779, 7
        %v781 = vsub.s32 0, %v780
        %v782 = vrot.slane %v319, %v781
        %v784 = vsel %vm325, %v777, 0
        %v787 = vsel %vm325, %v778, 0
        %789 = vmatprep.subr.mxu0 0.0
        %790 = vmatpush1.msra.mxu0 0.0
        %791 = vmatprep.subr.mxu0 0.0
        %792 = vmatpush1.msra.mxu0 0.0
        %793 = vmatprep.subr.mxu0 0.0
        %794 = vmatpush1.msra.mxu0 0.0
        %795 = vmatprep.subr.mxu0 0.0
        %796 = vmatpush1.msra.mxu0 0.0
        %797 = vmatprep.subr.mxu0 0.0
        %798 = vmatpush1.msra.mxu0 0.0
        %799 = vmatprep.subr.mxu0 0.0
        %800 = vmatpush1.msra.mxu0 0.0
        %801 = vmatprep.subr.mxu0 0.0
        %802 = vmatpush1.msra.mxu0 0.0
        %803 = vmatprep.subr.mxu0 0.0
        %804 = vmatpush1.msra.mxu0 0.0
        %805 = vmatprep.subr.mxu0 0.0
        %806 = vmatpush1.msra.mxu0 0.0
        %807 = vmatprep.subr.mxu0 0.0
        %808 = vmatpush1.msra.mxu0 0.0
        %809 = vmatprep.subr.mxu0 0.0
        %810 = vmatpush1.msra.mxu0 0.0
        %811 = vmatprep.subr.mxu0 0.0
        %812 = vmatpush1.msra.mxu0 0.0
        %813 = vmatprep.subr.mxu0 0.0
        %814 = vmatpush1.msra.mxu0 %v318
        %815 = vmatprep.subr.mxu0 0.0
        %816 = vmatpush1.msra.mxu0 %v317
        %817 = vmatprep.subr.mxu0 0.0
        %818 = vmatpush1.msra.mxu0 %v316
        %819 = vmatprep.subr.mxu0 0.0
        %820 = vmatpush1.msra.mxu0 %v315
        %821 = vmatprep.subr.mxu0 0.0
        %822 = vmatpush2.msra.mxu0 0.0
        %823 = vmatprep.subr.mxu0 0.0
        %824 = vmatpush2.msra.mxu0 0.0
        %825 = vmatprep.subr.mxu0 0.0
        %826 = vmatpush2.msra.mxu0 0.0
        %827 = vmatprep.subr.mxu0 0.0
        %828 = vmatpush2.msra.mxu0 0.0
        %829 = vmatprep.subr.mxu0 0.0
        %830 = vmatpush2.msra.mxu0 0.0
        %831 = vmatprep.subr.mxu0 0.0
        %832 = vmatpush2.msra.mxu0 0.0
        %833 = vmatprep.subr.mxu0 0.0
        %834 = vmatpush2.msra.mxu0 0.0
        %835 = vmatprep.subr.mxu0 0.0
        %836 = vmatpush2.msra.mxu0 0.0
        %837 = vmatprep.subr.mxu0 0.0
        %838 = vmatpush2.msra.mxu0 0.0
        %839 = vmatprep.subr.mxu0 0.0
        %840 = vmatpush2.msra.mxu0 0.0
        %841 = vmatprep.subr.mxu0 0.0
        %842 = vmatpush2.msra.mxu0 0.0
        %843 = vmatprep.subr.mxu0 0.0
        %844 = vmatpush2.msra.mxu0 0.0
        %845 = vmatprep.subr.mxu0 0.0
        %846 = vmatpush2.msra.mxu0 0.0
        %847 = vmatprep.subr.mxu0 0.0
        %848 = vmatpush2.msra.mxu0 0.0
        %849 = vmatprep.subr.mxu0 0.0
        %850 = vmatpush2.msra.mxu0 0.0
        %851 = vmatprep.subr.mxu0 0.0
        %852 = vmatpush2.msra.mxu0 0.0
        %853 = vmatprep.mubr.f32.mxu0 0.0
        %854 = vmatmul.mubr.f32.gmra.mxu0 %v784
        %v855 = vpop.f32.mrf.mxu0
        %v856 = vadd.f32 %v782, %v855
        %v857 = vpop.f32.mrf.mxu0
        %858 = vmatprep.mubr.f32.mxu0 0.0
        %859 = vmatmul.mubr.f32.gmra.mxu0 %v787
        %v860 = vpop.f32.mrf.mxu0
        %v861 = vadd.f32 %v782, %v860
        %v862 = vpop.f32.mrf.mxu0
        %863 = vdwg.mxu0
        %vm864 = vcmp.ge.f32.partialorder %v856, 0.0
        %vm865 = vcmp.ge.f32.partialorder %v861, 0.0
        %v866 = vmul.f32 %v856, 0.1
        %v867 = vmul.f32 %v861, 0.1
        %v868 = vsel %vm864, %v856, %v866
        %v869 = vsel %vm865, %v861, %v867
        %v870 = vld [vmem:[#allocation2 + $0x60] sm:$0xff]
        %v871 = vld [vmem:[#allocation2 + $0x68] sm:$0xff]
        %v872 = vld [vmem:[#allocation2 + $0x70] sm:$0xff]
        %v873 = vld [vmem:[#allocation2 + $0x78] sm:$0xff]
        %v874 = vld [vmem:[#allocation2 + $0x80] sm:$0x1]
        %v875 = vlaneseq
        %v876 = vshrl.u32 %v875, 7
        %v877 = vsub.s32 0, %v876
        %v878 = vrot.slane %v874, %v877
        %v880 = vsel %vm325, %v868, 0
        %v883 = vsel %vm325, %v869, 0
        %885 = vmatprep.subr.mxu0 0.0
        %886 = vmatpush1.msra.mxu0 0.0
        %887 = vmatprep.subr.mxu0 0.0
        %888 = vmatpush1.msra.mxu0 0.0
        %889 = vmatprep.subr.mxu0 0.0
        %890 = vmatpush1.msra.mxu0 0.0
        %891 = vmatprep.subr.mxu0 0.0
        %892 = vmatpush1.msra.mxu0 0.0
        %893 = vmatprep.subr.mxu0 0.0
        %894 = vmatpush1.msra.mxu0 0.0
        %895 = vmatprep.subr.mxu0 0.0
        %896 = vmatpush1.msra.mxu0 0.0
        %897 = vmatprep.subr.mxu0 0.0
        %898 = vmatpush1.msra.mxu0 0.0
        %899 = vmatprep.subr.mxu0 0.0
        %900 = vmatpush1.msra.mxu0 0.0
        %901 = vmatprep.subr.mxu0 0.0
        %902 = vmatpush1.msra.mxu0 0.0
        %903 = vmatprep.subr.mxu0 0.0
        %904 = vmatpush1.msra.mxu0 0.0
        %905 = vmatprep.subr.mxu0 0.0
        %906 = vmatpush1.msra.mxu0 0.0
        %907 = vmatprep.subr.mxu0 0.0
        %908 = vmatpush1.msra.mxu0 0.0
        %909 = vmatprep.subr.mxu0 0.0
        %910 = vmatpush1.msra.mxu0 %v873
        %911 = vmatprep.subr.mxu0 0.0
        %912 = vmatpush1.msra.mxu0 %v872
        %913 = vmatprep.subr.mxu0 0.0
        %914 = vmatpush1.msra.mxu0 %v871
        %915 = vmatprep.subr.mxu0 0.0
        %916 = vmatpush1.msra.mxu0 %v870
        %917 = vmatprep.subr.mxu0 0.0
        %918 = vmatpush2.msra.mxu0 0.0
        %919 = vmatprep.subr.mxu0 0.0
        %920 = vmatpush2.msra.mxu0 0.0
        %921 = vmatprep.subr.mxu0 0.0
        %922 = vmatpush2.msra.mxu0 0.0
        %923 = vmatprep.subr.mxu0 0.0
        %924 = vmatpush2.msra.mxu0 0.0
        %925 = vmatprep.subr.mxu0 0.0
        %926 = vmatpush2.msra.mxu0 0.0
        %927 = vmatprep.subr.mxu0 0.0
        %928 = vmatpush2.msra.mxu0 0.0
        %929 = vmatprep.subr.mxu0 0.0
        %930 = vmatpush2.msra.mxu0 0.0
        %931 = vmatprep.subr.mxu0 0.0
        %932 = vmatpush2.msra.mxu0 0.0
        %933 = vmatprep.subr.mxu0 0.0
        %934 = vmatpush2.msra.mxu0 0.0
        %935 = vmatprep.subr.mxu0 0.0
        %936 = vmatpush2.msra.mxu0 0.0
        %937 = vmatprep.subr.mxu0 0.0
        %938 = vmatpush2.msra.mxu0 0.0
        %939 = vmatprep.subr.mxu0 0.0
        %940 = vmatpush2.msra.mxu0 0.0
        %941 = vmatprep.subr.mxu0 0.0
        %942 = vmatpush2.msra.mxu0 0.0
        %943 = vmatprep.subr.mxu0 0.0
        %944 = vmatpush2.msra.mxu0 0.0
        %945 = vmatprep.subr.mxu0 0.0
        %946 = vmatpush2.msra.mxu0 0.0
        %947 = vmatprep.subr.mxu0 0.0
        %948 = vmatpush2.msra.mxu0 0.0
        %949 = vmatprep.mubr.f32.mxu0 0.0
        %950 = vmatmul.mubr.f32.gmra.mxu0 %v880
        %v951 = vpop.f32.mrf.mxu0
        %v952 = vadd.f32 %v878, %v951
        %v953 = vpop.f32.mrf.mxu0
        %954 = vmatprep.mubr.f32.mxu0 0.0
        %955 = vmatmul.mubr.f32.gmra.mxu0 %v883
        %v956 = vpop.f32.mrf.mxu0
        %v957 = vadd.f32 %v878, %v956
        %v958 = vpop.f32.mrf.mxu0
        %959 = vdwg.mxu0
        %960 = vst.msk [vmem:[%s205] sm:$0xff] %vm227, %v952
        %961 = vst.msk [vmem:[%s205 + $0x8] sm:$0xff] %vm227, %v957
        %p962 = scmp.lt.s32.totalorder %s15, 3
        %s963 = scalar_select %p962, %s15, 3
        %s964 = smul.addr %s963, 2
        %s965 = smul.addr %s964, 8
        %s966 = scalar_lea.vmem %s3, %s965
        // Predicated region
        $region37: #{tpu_custom_call.1} parent=31 // pred_check
          %p967 = pneg %p106
        $region38: #{tpu_custom_call.1} parent=31 // pred_check_branch
          %969 = sbr.rel (%p967) target = $region40
        $region39: #{tpu_custom_call.1} parent=31 // pred_region
          _
        $region40: #{tpu_custom_call.1} parent=31 // pred_fallthru
          _
      $region32: #{tpu_custom_call.1} parent=5 // pred_fallthru
        _
      %p970 = scmp.le.s32.totalorder 2, %s10
      // Predicated region
      $region41: #{tpu_custom_call.1} parent=5 // pred_check
        %p971 = pneg %p970
      $region42: #{tpu_custom_call.1} parent=5 // pred_check_branch
        %973 = sbr.rel (%p971) target = $region44
      $region43: #{tpu_custom_call.1} parent=5 // pred_region
        %s974 = ssub.s32 %s10, 2
        // Predicated region
        $region45: #{tpu_custom_call.1} parent=43 // pred_check
          %p975 = pneg %p112
        $region46: #{tpu_custom_call.1} parent=43 // pred_check_branch
          %977 = sbr.rel (%p975) target = $region48
        $region47: #{tpu_custom_call.1} parent=43 // pred_region
          %p978 = scmp.lt.s32.totalorder %s16, 3
          %s979 = scalar_select %p978, %s16, 3
          %s980 = smul.addr %s979, 2
          %s981 = smul.addr %s980, 8
          %s982 = scalar_lea.vmem %s3, %s981
        $region48: #{tpu_custom_call.1} parent=43 // pred_fallthru
          _
      $region44: #{tpu_custom_call.1} parent=5 // pred_fallthru
        _
    $region6: #{tpu_custom_call.1} parent=1 // loop_footer
      %s14 = sadd.s32 1, %s10
    $region7: #{tpu_custom_call.1} parent=1 // loop_footer_branch
      %9 = sbr.rel target = $region3
    $region8: #{tpu_custom_call.1} parent=1 // loop_exit
      _
    %983 = vsyncpa [#allocation3], 1
    %s984 = scalar_lea.sflag [#allocation3], 1
    %985 = vsyncpa %s984, 1

</llo_original>
